<compile_context>
chip_gen: v7x
topology: tpu7x:2x2x1
jax: 0.10.0
libtpu: 0.0.40
codegen_flags: <defaults>
</compile_context>

<pallas_src>
import jax
import jax.numpy as jnp
from jax import lax
from jax.experimental import pallas as pl
from jax.experimental.pallas import tpu as pltpu

LANE = 128


def _round_up(v, m):
    return ((v + m - 1) // m) * m


def general_attention_kernel(x_ref, wt_ref, b_ref, o_ref):
    # x_ref  : (BBLK, S_pad, Hp)  padded input block (queries + keys/values)
    # wt_ref : (Hp, Hp)           pre-transposed linear weight (W^T, zero-padded)
    # b_ref  : (1, Hp)            linear bias (zero-padded)
    # o_ref  : (BBLK, TQ, Hp)     output block for this query tile
    bblk, s_pad, hp = x_ref.shape
    tq = o_ref.shape[1]                     # key tile size == query tile size
    qi = pl.program_id(1)
    q0 = pl.multiple_of(qi * tq, tq)

    # nn.Linear on the query tile: one (BBLK*TQ, Hp) @ (Hp, Hp) MXU matmul.
    # tq is a multiple of 8, so the reshape is a free leading-dim merge.
    xq = x_ref[:, pl.ds(q0, tq), :]
    corr = jnp.dot(xq.reshape(bblk * tq, hp), wt_ref[...],
                   preferred_element_type=jnp.float32) + b_ref[...]
    corr = corr.reshape(bblk, tq, hp)

    row = q0 + lax.broadcasted_iota(jnp.int32, (tq, tq), 0)   # global query idx

    def key_block(k, carry):
        num, den = carry
        k0 = pl.multiple_of(k * tq, tq)
        xk = x_ref[:, pl.ds(k0, tq), :]                       # (BBLK, TQ, Hp)
        # scores[b,i,j] = exp(corr[b,i] . x[b,j]); unstabilized to match torch.
        scores = jnp.exp(jnp.einsum("bih,bjh->bij", corr, xk,
                                    preferred_element_type=jnp.float32))
        col = k0 + lax.broadcasted_iota(jnp.int32, (tq, tq), 1)
        masked = jnp.where(row > col, scores, 0.0)            # strict lower tri
        den = den + jnp.sum(masked, axis=-1, keepdims=True)
        num = num + jnp.einsum("bij,bjh->bih", masked, xk,
                               preferred_element_type=jnp.float32)
        return num, den

    # Key blocks with k0 >= q0 + tq - 1 can never satisfy i > j, so they are
    # skipped entirely: n_k = qi + 1 (exact for equal query/key tile sizes).
    n_k = qi + 1
    num0 = jnp.zeros((bblk, tq, hp), jnp.float32)
    den0 = jnp.zeros((bblk, tq, 1), jnp.float32)
    num, den = lax.fori_loop(0, n_k, key_block, (num0, den0))

    # weights = masked / (den + 1e-10); one exact reciprocal per row, then mul.
    o_ref[...] = (num * pl.reciprocal(den + 1e-10, approx=False)
                  ).astype(o_ref.dtype)


def general_attention(x, w, b):
    """x: (B, S, H) f32, w: (H, H) nn.Linear weight (out, in), b: (H,)."""
    B, S, H = x.shape
    Hp = _round_up(H, LANE)

    # --- generation-aware VMEM budget (v5e/v6e: 128 MiB, v7x: 64 MiB per TC).
    try:
        vmem_cap = int(pltpu.get_tpu_info().vmem_capacity_bytes)
    except Exception:
        vmem_cap = 64 * 1024 * 1024          # conservative (v7x-sized) fallback
    vmem_limit = max(32 * 1024 * 1024,
                     min(vmem_cap - 8 * 1024 * 1024, 128 * 1024 * 1024))
    budget = int(0.75 * vmem_limit)          # what our own accounting may use

    # --- sequence tiling: tq == key block size; S padded so reshapes/DS align.
    TILE = 256
    s8 = _round_up(S, 8)
    if s8 <= TILE:
        tq = s8
        S_pad = s8
    else:
        tq = TILE if (S % TILE == 0 or S >= 4 * TILE) else TILE // 2
        S_pad = _round_up(S, tq)

    # --- per-step VMEM estimate (double buffers + in-kernel temps), in bytes.
    def vmem_bytes(bb):
        return 4 * (2 * bb * S_pad * Hp          # x block, double-buffered
                    + 2 * bb * tq * Hp           # out block, double-buffered
                    + 2 * (Hp * Hp + Hp)         # W^T + bias, double-buffered
                    + 4 * bb * tq * Hp           # corr, q/k slices, accumulator
                    + 4 * bb * tq * tq)          # scores / exp / masked temps

    # --- batch blocking: grow toward ~1024 fused Linear rows within budget.
    TARGET_ROWS = 1024
    bblk = 1
    while bblk < B and bblk * tq < TARGET_ROWS and vmem_bytes(2 * bblk) <= budget:
        bblk *= 2
    bblk = max(1, min(bblk, B))
    # v7x has 2 TensorCores: make sure there are at least 2 grid steps.
    if (_round_up(B, bblk) // bblk) * (S_pad // tq) < 2 and B >= 2:
        bblk = (B + 1) // 2
    B_pad = _round_up(B, bblk)
    nb = B_pad // bblk
    nq = S_pad // tq
    # TODO(synk): if vmem_bytes(1) still exceeds the budget (extremely long S),
    # stream key blocks from HBM with a manual double buffer instead of keeping
    # the full (bblk, S_pad, Hp) x block resident.

    # --- exact zero-padding (zero rows/cols contribute 0; padded keys have
    #     j >= S >= i so the strict mask removes them; padded outputs sliced).
    if (B_pad, S_pad, Hp) != (B, S, H):
        x_p = jnp.pad(x, ((0, B_pad - B), (0, S_pad - S), (0, Hp - H)))
    else:
        x_p = x
    w_p = jnp.pad(w, ((0, Hp - H), (0, Hp - H))) if Hp != H else w
    b_p = jnp.pad(b, ((0, Hp - H),)) if Hp != H else b
    wt = w_p.T                        # pre-transpose so kernel does x @ W^T
    bias = b_p.reshape(1, Hp)

    cost = pl.CostEstimate(
        flops=int(2 * B * S * Hp * Hp + 4 * B * S * S * Hp),
        transcendentals=int(B * S * S),
        bytes_accessed=int(4 * (2 * B * S * Hp + Hp * Hp + Hp)),
    )

    # TODO(synk): single-buffer W^T/bias (pipeline_mode=pl.Buffered(1)) once
    # confirmed supported; their block index never changes.
    out = pl.pallas_call(
        general_attention_kernel,
        out_shape=jax.ShapeDtypeStruct((B_pad, S_pad, Hp), jnp.float32),
        grid_spec=pltpu.PrefetchScalarGridSpec(
            num_scalar_prefetch=0,
            grid=(nb, nq),
            in_specs=[
                # Full-S block per batch block; index is constant across the
                # query axis so the DMA is only re-issued when bi changes.
                pl.BlockSpec((bblk, S_pad, Hp), lambda bi, qi: (bi, 0, 0)),
                pl.BlockSpec((Hp, Hp), lambda bi, qi: (0, 0)),
                pl.BlockSpec((1, Hp), lambda bi, qi: (0, 0)),
            ],
            out_specs=pl.BlockSpec((bblk, tq, Hp), lambda bi, qi: (bi, qi, 0)),
        ),
        compiler_params=pltpu.CompilerParams(
            dimension_semantics=("parallel", "arbitrary"),
            vmem_limit_bytes=vmem_limit),
        cost_estimate=cost,
    )(x_p, wt, bias)

    return out[:B, :S, :H]


def general_attention_ref(x, w, b):
    """Pure-JAX reference mirroring the PyTorch forward exactly."""
    B, S, H = x.shape
    corr = jnp.einsum("bsh,oh->bso", x, w) + b                  # nn.Linear
    scores = jnp.exp(jnp.einsum("bih,bjh->bij", corr, x))       # (B, S, S)
    mask = jnp.triu(jnp.ones((S, S), jnp.float32), k=1).T[None]
    masked = scores * mask
    denom = jnp.sum(masked, axis=-1, keepdims=True) + 1e-10
    weights = masked / denom
    return jnp.einsum("bij,bjh->bih", weights, x)


if __name__ == "__main__":
    # --- test 1: small shape consistent with the module (batch=2, seq=8, hidden=32)
    B, S, H = 2, 8, 32
    kx, kw, kb = jax.random.split(jax.random.PRNGKey(0), 3)
    bound = 1.0 / (H ** 0.5)
    x = jax.random.normal(kx, (B, S, H), dtype=jnp.float32) * 0.1
    w = jax.random.uniform(kw, (H, H), jnp.float32, -bound, bound)
    b = jax.random.uniform(kb, (H,), jnp.float32, -bound, bound)

    out = jax.block_until_ready(general_attention(x, w, b))
    ref = general_attention_ref(x, w, b)
    assert out.shape == (B, S, H)
    assert jnp.allclose(out, ref, atol=1e-5, rtol=1e-5), "mismatch vs reference"

    # --- test 2: exercises the multi-query-tile path with block skipping and
    #     batch/sequence/hidden padding (still a small shape).
    B2, S2, H2 = 2, 272, 48
    k2x, k2w, k2b = jax.random.split(jax.random.PRNGKey(0), 3)
    bound2 = 1.0 / (H2 ** 0.5)
    x2 = jax.random.normal(k2x, (B2, S2, H2), dtype=jnp.float32) * 0.05
    w2 = jax.random.uniform(k2w, (H2, H2), jnp.float32, -bound2, bound2)
    b2 = jax.random.uniform(k2b, (H2,), jnp.float32, -bound2, bound2)

    out2 = jax.block_until_ready(general_attention(x2, w2, b2))
    ref2 = general_attention_ref(x2, w2, b2)
    assert out2.shape == (B2, S2, H2)
    assert jnp.allclose(out2, ref2, atol=1e-5, rtol=1e-5), "tiled path mismatch"

    print("KERNEL_OK")
</pallas_src>

<mosaic_0001>
module attributes {stable_mosaic.version = 11 : i64} {
  func.func @general_attention_kernel(%arg0: i32, %arg1: i32, %arg2: memref<1x8x128xf32, #tpu.memory_space<vmem>>, %arg3: memref<128x128xf32, #tpu.memory_space<vmem>>, %arg4: memref<1x128xf32, #tpu.memory_space<vmem>>, %arg5: memref<1x8x128xf32, #tpu.memory_space<vmem>>) attributes {dimension_semantics = [#tpu.dimension_semantics<parallel>, #tpu.dimension_semantics<arbitrary>], iteration_bounds = array<i64: 2, 1>, scalar_prefetch = 0 : i64, scratch_operands = 0 : i64, tpu.core_type = #tpu.core_type<tc>, window_params = [{transform_indices = @transform_0, window_bounds = array<i64: 1, 8, 128>}, {pipeline_mode = #tpu.pipeline_mode<synchronous>, transform_indices = @transform_1, window_bounds = array<i64: 128, 128>}, {pipeline_mode = #tpu.pipeline_mode<synchronous>, transform_indices = @transform_2, window_bounds = array<i64: 1, 128>}, {transform_indices = @transform_3, window_bounds = array<i64: 1, 8, 128>}]} {
    %c8_i32 = arith.constant 8 : i32
    %0 = arith.muli %arg1, %c8_i32 : i32
    %1 = tpu.assume_multiple %0, 8 : i32
    %c0 = arith.constant 0 : index
    %2 = arith.index_cast %1 : i32 to index
    %c0_0 = arith.constant 0 : index
    %3 = vector.load %arg2[%c0, %2, %c0_0] : memref<1x8x128xf32, #tpu.memory_space<vmem>>, vector<1x8x128xf32>
    %4 = vector.shape_cast %3 : vector<1x8x128xf32> to vector<8x128xf32>
    %c0_1 = arith.constant 0 : index
    %c0_2 = arith.constant 0 : index
    %5 = vector.load %arg3[%c0_1, %c0_2] : memref<128x128xf32, #tpu.memory_space<vmem>>, vector<128x128xf32>
    %cst = arith.constant dense<0.000000e+00> : vector<8x128xf32>
    %6 = tpu.matmul %4, %5, %cst {dimension_numbers = #tpu.dot_dimension_numbers<[1], [0], [0], [1], [0, 0, 1, 1], [], []>} : vector<8x128xf32>, vector<128x128xf32>, vector<8x128xf32> -> vector<8x128xf32>
    %c0_3 = arith.constant 0 : index
    %c0_4 = arith.constant 0 : index
    %7 = vector.load %arg4[%c0_3, %c0_4] : memref<1x128xf32, #tpu.memory_space<vmem>>, vector<1x128xf32>
    %8 = vector.broadcast %7 : vector<1x128xf32> to vector<8x128xf32>
    %9 = arith.addf %6, %8 : vector<8x128xf32>
    %10 = vector.shape_cast %9 : vector<8x128xf32> to vector<1x8x128xf32>
    %11 = tpu.iota {dimensions = array<i32: 0>} : vector<8x8xi32>
    %12 = vector.broadcast %1 : i32 to vector<8x8xi32>
    %13 = arith.addi %12, %11 : vector<8x8xi32>
    %c1_i32 = arith.constant 1 : i32
    %14 = arith.addi %arg1, %c1_i32 : i32
    %cst_5 = arith.constant 0.000000e+00 : f32
    %15 = vector.broadcast %cst_5 : f32 to vector<1x8x128xf32>
    %cst_6 = arith.constant 0.000000e+00 : f32
    %16 = vector.broadcast %cst_6 : f32 to vector<1x8x1xf32>
    %c0_i32 = arith.constant 0 : i32
    %17 = arith.subi %14, %c0_i32 : i32
    %18 = arith.addi %c0_i32, %17 : i32
    %c1_i32_7 = arith.constant 1 : i32
    %19:2 = scf.for %arg6 = %c0_i32 to %18 step %c1_i32_7 iter_args(%arg7 = %15, %arg8 = %16) -> (vector<1x8x128xf32>, vector<1x8x1xf32>)  : i32 {
      %c8_i32_12 = arith.constant 8 : i32
      %26 = arith.muli %arg6, %c8_i32_12 : i32
      %27 = tpu.assume_multiple %26, 8 : i32
      %c0_13 = arith.constant 0 : index
      %28 = arith.index_cast %27 : i32 to index
      %c0_14 = arith.constant 0 : index
      %29 = vector.load %arg2[%c0_13, %28, %c0_14] : memref<1x8x128xf32, #tpu.memory_space<vmem>>, vector<1x8x128xf32>
      "tpu.trace_start"() <{level = 10 : i32, message = "bih,bjh->bij"}> : () -> ()
      %cst_15 = arith.constant dense<0.000000e+00> : vector<1x8x8xf32>
      %30 = tpu.matmul %10, %29, %cst_15 {dimension_numbers = #tpu.dot_dimension_numbers<[2], [2], [1], [1], [0, 0, 0, 1, 1, 1], [0], [0]>} : vector<1x8x128xf32>, vector<1x8x128xf32>, vector<1x8x8xf32> -> vector<1x8x8xf32>
      "tpu.trace_stop"() : () -> ()
      %31 = math.exp %30 : vector<1x8x8xf32>
      %32 = tpu.iota {dimensions = array<i32: 1>} : vector<8x8xi32>
      %33 = vector.broadcast %27 : i32 to vector<8x8xi32>
      %34 = arith.addi %33, %32 : vector<8x8xi32>
      %35 = arith.cmpi sgt, %13, %34 : vector<8x8xi32>
      %cst_16 = arith.constant 0.000000e+00 : f32
      %36 = vector.shape_cast %35 : vector<8x8xi1> to vector<1x8x8xi1>
      %37 = vector.broadcast %cst_16 : f32 to vector<1x8x8xf32>
      %38 = arith.select %36, %31, %37 : vector<1x8x8xi1>, vector<1x8x8xf32>
      %cst_17 = arith.constant dense<0.000000e+00> : vector<1x8xf32>
      %39 = vector.multi_reduction <add>, %38, %cst_17 [2] : vector<1x8x8xf32> to vector<1x8xf32>
      %40 = vector.shape_cast %39 : vector<1x8xf32> to vector<1x8x1xf32>
      %41 = arith.addf %arg8, %40 : vector<1x8x1xf32>
      "tpu.trace_start"() <{level = 10 : i32, message = "bij,bjh->bih"}> : () -> ()
      %cst_18 = arith.constant dense<0.000000e+00> : vector<1x8x128xf32>
      %42 = tpu.matmul %38, %29, %cst_18 {dimension_numbers = #tpu.dot_dimension_numbers<[2], [1], [1], [2], [0, 0, 0, 1, 1, 2], [0], [0]>} : vector<1x8x8xf32>, vector<1x8x128xf32>, vector<1x8x128xf32> -> vector<1x8x128xf32>
      "tpu.trace_stop"() : () -> ()
      %43 = arith.addf %arg7, %42 : vector<1x8x128xf32>
      scf.yield %43, %41 : vector<1x8x128xf32>, vector<1x8x1xf32>
    }
    %cst_8 = arith.constant 1.000000e-10 : f32
    %20 = vector.broadcast %cst_8 : f32 to vector<1x8x1xf32>
    %21 = arith.addf %19#1, %20 : vector<1x8x1xf32>
    %22 = tpu.reciprocal %21 : vector<1x8x1xf32> -> vector<1x8x1xf32>
    %23 = vector.broadcast %22 : vector<1x8x1xf32> to vector<1x8x128xf32>
    %24 = arith.mulf %19#0, %23 : vector<1x8x128xf32>
    %c0_9 = arith.constant 0 : index
    %c0_10 = arith.constant 0 : index
    %c0_11 = arith.constant 0 : index
    %25 = vector.load %arg5[%c0_9, %c0_10, %c0_11] : memref<1x8x128xf32, #tpu.memory_space<vmem>>, vector<1x8x128xf32>
    tpu.vector_store %arg5[%c0_9, %c0_10, %c0_11], %24 {strides = array<i32>} : memref<1x8x128xf32, #tpu.memory_space<vmem>>, vector<1x8x128xf32>,
    return
  }
  func.func @transform_0(%arg0: i32, %arg1: i32) -> (i32, i32, i32) {
    %c0_i32 = arith.constant 0 : i32
    %c0_i32_0 = arith.constant 0 : i32
    %c0_i32_1 = arith.constant 0 : i32
    return %arg0, %c0_i32, %c0_i32_0 : i32, i32, i32
  }
  func.func @transform_1(%arg0: i32, %arg1: i32) -> (i32, i32) {
    %c0_i32 = arith.constant 0 : i32
    %c0_i32_0 = arith.constant 0 : i32
    %c0_i32_1 = arith.constant 0 : i32
    return %c0_i32, %c0_i32_0 : i32, i32
  }
  func.func @transform_2(%arg0: i32, %arg1: i32) -> (i32, i32) {
    %c0_i32 = arith.constant 0 : i32
    %c0_i32_0 = arith.constant 0 : i32
    %c0_i32_1 = arith.constant 0 : i32
    return %c0_i32, %c0_i32_0 : i32, i32
  }
  func.func @transform_3(%arg0: i32, %arg1: i32) -> (i32, i32, i32) {
    %c0_i32 = arith.constant 0 : i32
    %c0_i32_0 = arith.constant 0 : i32
    return %arg0, %arg1, %c0_i32 : i32, i32, i32
  }
}

</mosaic_0001>

<llo_original>
// kernel: tpu_custom_call.1
$region0: #{tpu_custom_call.1}
  #allocation0 [shape = 'u32[]', space=smem, size = 0x4, offset = 0x4, fixed_abs, tag = 'smem constant byte address 0x4 - core index']
  #allocation1 [shape = 'u32[144,128]{1,0:T(1,128)}', space=vmem, size = 0x12000, scoped, tag = 'internal scratch']
  %s0 = inlined_call_operand.hbm [shape: f32[2,8,128], index: 0, kind: input, shape index: {}]
  %s1 = inlined_call_operand.hbm [shape: f32[128,128], index: 1, kind: input, shape index: {}]
  %s2 = inlined_call_operand.vmem [shape: f32[1,128], index: 2, kind: input, shape index: {}]
  %s3 = inlined_call_operand.hbm [shape: f32[2,8,128], index: 3, kind: output, shape index: {}]
  %s4 = sld [smem:[#allocation0]]
  $region60: #{tpu_custom_call.1} parent=0
    _
  %s6 = ssub.s32 1, %s4
  %s7 = scalar_select 0, %s6, %s4
  $region1: #{tpu_custom_call.1} parent=0
    #allocation2 [shape = 'u8[8192]{0}', space=vmem, size = 0x2000, scoped, tag = 'input window, operand 0']
    #allocation3 [shape = 's32[2]{0}', space=sflag, size = 0x8, scoped, tag = 'scoped memory for tpu_custom_call.1']
    #allocation4 [shape = 's32[2]{0}', space=sflag, size = 0x8, scoped, tag = 'scoped memory for tpu_custom_call.1']
    #allocation5 [shape = 'u8[65536]{0}', space=vmem, size = 0x10000, scoped, tag = 'input window, operand 1, single buffered']
    #allocation6 [shape = 's32[1]{0}', space=sflag, size = 0x4, scoped, tag = 'scoped memory for tpu_custom_call.1']
    #allocation7 [shape = 'u8[8192]{0}', space=vmem, size = 0x2000, scoped, tag = 'output window, operand 0']
    %8 = vsyncpa [#allocation3], 0
    %s9 = scalar_lea.sflag [#allocation3], 1
    %10 = vsyncpa %s9, 0
    %11 = vsyncpa [#allocation6], 0
    %12 = vsyncpa [#allocation4], 0
    %s13 = scalar_lea.sflag [#allocation4], 1
    %14 = vsyncpa %s13, 0
    loop: start=0, step=1, limit=4
    $region2: #{tpu_custom_call.1} parent=1 // loop_pre_header
      _
    $region3: #{tpu_custom_call.1} parent=1 // loop_header
      %s16 = sphi 0, %s20
      %p17 = scmp.ge.s32.totalorder %s16, 4
      %s23 = sphi 0, %s35
      %s24 = sphi 0, %s31
      %s25 = sphi 0, %s23
      %s26 = sphi 0, %s24
      %s27 = sphi 0, %s25
      %s28 = sphi 0, %s26
      %s38 = sphi 0, %s40
      %s41 = sphi 0, %s38
      %s42 = sphi 0, %s41
      %s58 = sphi 0, %s42
      %s62 = sphi 0, %s62
      %s64 = sphi 0, %s62
      %s65 = sphi 0, %s64
      %s79 = sphi 0, %s65
      %s83 = sphi 0, %s83
      %s85 = sphi 0, %s83
      %s86 = sphi 0, %s85
      %s100 = sphi 0, %s86
      %s108 = sphi 0, %s110
      %s111 = sphi 0, %s108
      %s112 = sphi 0, %s111
      %s128 = sphi 0, %s112
    $region4: #{tpu_custom_call.1} parent=1 // loop_header_branch
      %19 = sbr.rel (%p17) target = $region8
    $region5: #{tpu_custom_call.1} parent=1 // loop_body
      %s21 = ssub.s32 %s16, 1
      %s22 = ssub.s32 %s16, 2
      %s29 = sadd.s32 1, %s24
      %p30 = scmp.ge.s32.totalorder %s29, 1
      %s31 = scalar_select %p30, 0, %s29
      %s32 = sadd.s32 1, %s23
      %s33 = scalar_select %p30, %s32, %s23
      %p34 = scmp.ge.s32.totalorder %s33, 2
      %s35 = scalar_select %p34, 0, %s33
      %s36 = ssub.s32 %s23, %s35
      %p37 = scmp.eq.s32.totalorder %s36, 0
      %s39 = sadd.s32 %s38, 1
      %s40 = scalar_select %p37, %s38, %s39
      %p43 = pneg %p37
      %p44 = scmp.eq.s32.totalorder %s16, 1
      %p45 = por %p43, %p44
      %p46 = scmp.ne.s32.totalorder %s38, %s41
      %p47 = scmp.eq.s32.totalorder %s16, 0
      %p48 = por %p46, %p47
      %p49 = scmp.ne.s32.totalorder %s38, %s41
      %p50 = scmp.eq.s32.totalorder %s21, 1
      %p51 = por %p49, %p50
      %p52 = scmp.ne.s32.totalorder %s41, %s42
      %p53 = scmp.eq.s32.totalorder %s21, 0
      %p54 = por %p52, %p53
      %p55 = scmp.ne.s32.totalorder %s41, %s42
      %p56 = scmp.eq.s32.totalorder %s22, 1
      %p57 = por %p55, %p56
      %p59 = scmp.ne.s32.totalorder %s42, %s58
      %p60 = scmp.eq.s32.totalorder %s22, 0
      %p61 = por %p59, %p60
      %s63 = sadd.s32 %s62, 1
      %p66 = scmp.eq.s32.totalorder %s16, 1
      %p67 = scmp.ne.s32.totalorder %s62, %s64
      %p68 = scmp.eq.s32.totalorder %s16, 0
      %p69 = por %p67, %p68
      %p70 = scmp.ne.s32.totalorder %s62, %s64
      %p71 = scmp.eq.s32.totalorder %s21, 1
      %p72 = por %p70, %p71
      %p73 = scmp.ne.s32.totalorder %s64, %s65
      %p74 = scmp.eq.s32.totalorder %s21, 0
      %p75 = por %p73, %p74
      %p76 = scmp.ne.s32.totalorder %s64, %s65
      %p77 = scmp.eq.s32.totalorder %s22, 1
      %p78 = por %p76, %p77
      %p80 = scmp.ne.s32.totalorder %s65, %s79
      %p81 = scmp.eq.s32.totalorder %s22, 0
      %p82 = por %p80, %p81
      %s84 = sadd.s32 %s83, 1
      %p87 = scmp.eq.s32.totalorder %s16, 1
      %p88 = scmp.ne.s32.totalorder %s83, %s85
      %p89 = scmp.eq.s32.totalorder %s16, 0
      %p90 = por %p88, %p89
      %p91 = scmp.ne.s32.totalorder %s83, %s85
      %p92 = scmp.eq.s32.totalorder %s21, 1
      %p93 = por %p91, %p92
      %p94 = scmp.ne.s32.totalorder %s85, %s86
      %p95 = scmp.eq.s32.totalorder %s21, 0
      %p96 = por %p94, %p95
      %p97 = scmp.ne.s32.totalorder %s85, %s86
      %p98 = scmp.eq.s32.totalorder %s22, 1
      %p99 = por %p97, %p98
      %p101 = scmp.ne.s32.totalorder %s86, %s100
      %p102 = scmp.eq.s32.totalorder %s22, 0
      %p103 = por %p101, %p102
      %s104 = ssub.s32 %s23, %s35
      %s105 = ssub.s32 %s24, %s31
      %s106 = sor.u32 %s104, %s105
      %p107 = scmp.eq.s32.totalorder %s106, 0
      %s109 = sadd.s32 %s108, 1
      %s110 = scalar_select %p107, %s108, %s109
      %p113 = pneg %p107
      %p114 = scmp.eq.s32.totalorder %s16, 1
      %p115 = por %p113, %p114
      %p116 = scmp.ne.s32.totalorder %s108, %s111
      %p117 = scmp.eq.s32.totalorder %s16, 0
      %p118 = por %p116, %p117
      %p119 = scmp.ne.s32.totalorder %s108, %s111
      %p120 = scmp.eq.s32.totalorder %s21, 1
      %p121 = por %p119, %p120
      %p122 = scmp.ne.s32.totalorder %s111, %s112
      %p123 = scmp.eq.s32.totalorder %s21, 0
      %p124 = por %p122, %p123
      %p125 = scmp.ne.s32.totalorder %s111, %s112
      %p126 = scmp.eq.s32.totalorder %s22, 1
      %p127 = por %p125, %p126
      %p129 = scmp.ne.s32.totalorder %s112, %s128
      %p130 = scmp.eq.s32.totalorder %s22, 0
      %p131 = por %p129, %p130
      %p132 = scmp.le.s32.totalorder 1, %s16
      %p133 = scmp.lt.s32.totalorder %s16, 3
      %p134 = pnand %p132, %p133
      %p135 = pneg %p134
      // Predicated region
      $region9: #{tpu_custom_call.1} parent=5 // pred_check
        _
      $region10: #{tpu_custom_call.1} parent=5 // pred_check_branch
        %137 = sbr.rel (%p134) target = $region12
      $region11: #{tpu_custom_call.1} parent=5 // pred_region
        %s138 = ssub.s32 %s16, 1
        // Predicated region
        $region13: #{tpu_custom_call.1} parent=11 // pred_check
          %p139 = pneg %p75
        $region14: #{tpu_custom_call.1} parent=11 // pred_check_branch
          %141 = sbr.rel (%p139) target = $region16
        $region15: #{tpu_custom_call.1} parent=11 // pred_region
          %s143 = ssub.s32 2048, 2048
          %144 = vsyncadd [#allocation6], %s143
          %s145 = sshll.u32 [#allocation5], 4
          %s146 = int_to_ptr.vmem [resolvable:$true] %s145
          %151 = dma.hbm_to_vmem [thread:$0]  %s1, 2048, %s146, [#allocation6], 128, 128, 8
        $region16: #{tpu_custom_call.1} parent=11 // pred_fallthru
          _
        // Predicated region
        $region17: #{tpu_custom_call.1} parent=11 // pred_check
          %p152 = pneg %p96
        $region18: #{tpu_custom_call.1} parent=11 // pred_check_branch
          %154 = sbr.rel (%p152) target = $region20
        $region19: #{tpu_custom_call.1} parent=11 // pred_region
          _
        $region20: #{tpu_custom_call.1} parent=11 // pred_fallthru
          _
      $region12: #{tpu_custom_call.1} parent=5 // pred_fallthru
        _
      %p155 = scmp.lt.s32.totalorder %s16, 2
      // Predicated region
      $region21: #{tpu_custom_call.1} parent=5 // pred_check
        %p156 = pneg %p155
      $region22: #{tpu_custom_call.1} parent=5 // pred_check_branch
        %158 = sbr.rel (%p156) target = $region24
      $region23: #{tpu_custom_call.1} parent=5 // pred_region
        // Predicated region
        $region25: #{tpu_custom_call.1} parent=23 // pred_check
          %p159 = pneg %p48
        $region26: #{tpu_custom_call.1} parent=23 // pred_check_branch
          %161 = sbr.rel (%p159) target = $region28
        $region27: #{tpu_custom_call.1} parent=23 // pred_region
          %s162 = sand.u32 %s38, 1
          %s163 = scalar_lea.sflag [#allocation3], %s162
          %s164 = sand.u32 %s38, 1
          %s165 = smul.addr %s164, 8
          %s166 = scalar_lea.vmem [#allocation2], %s165
          %s168 = ssub.s32 128, 128
          %169 = vsyncadd %s163, %s168
          %s170 = smul.addr %s23, 128
          %s171 = scalar_lea.hbm %s0, %s170
          %s173 = sshll.u32 %s166, 4
          %s174 = int_to_ptr.vmem [resolvable:$true] %s173
          %176 = dma.hbm_to_vmem [thread:$0]  %s171, 128, %s174, %s163
        $region28: #{tpu_custom_call.1} parent=23 // pred_fallthru
          _
      $region24: #{tpu_custom_call.1} parent=5 // pred_fallthru
        _
      %p177 = scmp.le.s32.totalorder 1, %s16
      %p178 = scmp.lt.s32.totalorder %s16, 3
      %p179 = pnand %p177, %p178
      %p180 = pneg %p179
      // Predicated region
      $region29: #{tpu_custom_call.1} parent=5 // pred_check
        _
      $region30: #{tpu_custom_call.1} parent=5 // pred_check_branch
        %182 = sbr.rel (%p179) target = $region32
      $region31: #{tpu_custom_call.1} parent=5 // pred_region
        %s183 = ssub.s32 %s16, 1
        %s184 = sand.u32 %s41, 1
        %s185 = scalar_lea.sflag [#allocation3], %s184
        %s186 = sand.u32 %s41, 1
        %s187 = smul.addr %s186, 8
        %s188 = scalar_lea.vmem [#allocation2], %s187
        // Predicated region
        $region33: #{tpu_custom_call.1} parent=31 // pred_check
          %p189 = pneg %p54
        $region34: #{tpu_custom_call.1} parent=31 // pred_check_branch
          %191 = sbr.rel (%p189) target = $region36
        $region35: #{tpu_custom_call.1} parent=31 // pred_region
          %192 = dma.done %s185, 128
        $region36: #{tpu_custom_call.1} parent=31 // pred_fallthru
          _
        // Predicated region
        $region37: #{tpu_custom_call.1} parent=31 // pred_check
          %p193 = pneg %p75
        $region38: #{tpu_custom_call.1} parent=31 // pred_check_branch
          %195 = sbr.rel (%p193) target = $region40
        $region39: #{tpu_custom_call.1} parent=31 // pred_region
          %196 = dma.done [#allocation6], 2048
        $region40: #{tpu_custom_call.1} parent=31 // pred_fallthru
          _
        %s197 = sand.u32 %s41, 1
        %s198 = scalar_lea.sflag [#allocation3], %s197
        %s199 = sand.u32 %s41, 1
        %s200 = smul.addr %s199, 8
        %s201 = scalar_lea.vmem [#allocation2], %s200
        %p202 = pneg %p54
        %p203 = pneg %p51
        %p204 = pneg %p75
        %p205 = pneg %p72
        %p206 = pneg %p96
        %p207 = pneg %p93
        %p208 = pneg %p124
        %p209 = pneg %p121
        %s210 = sand.u32 %s111, 1
        %s211 = scalar_lea.sflag [#allocation4], %s210
        %s212 = sand.u32 %s111, 1
        %s213 = smul.addr %s212, 8
        %s214 = scalar_lea.vmem [#allocation7], %s213
        %s215 = smul.u32 %s26, 8
        %s216 = scalar_lea.vmem %s188, %s215 [#allocation2]
        %v217 = vld [vmem:[%s216] sm:$0xff]
        %v218 = vld [vmem:[#allocation5] sm:$0xff]
        %v219 = vld [vmem:[#allocation5 + $0x8] sm:$0xff]
        %v220 = vld [vmem:[#allocation5 + $0x10] sm:$0xff]
        %v221 = vld [vmem:[#allocation5 + $0x18] sm:$0xff]
        %v222 = vld [vmem:[#allocation5 + $0x20] sm:$0xff]
        %v223 = vld [vmem:[#allocation5 + $0x28] sm:$0xff]
        %v224 = vld [vmem:[#allocation5 + $0x30] sm:$0xff]
        %v225 = vld [vmem:[#allocation5 + $0x38] sm:$0xff]
        %v226 = vld [vmem:[#allocation5 + $0x40] sm:$0xff]
        %v227 = vld [vmem:[#allocation5 + $0x48] sm:$0xff]
        %v228 = vld [vmem:[#allocation5 + $0x50] sm:$0xff]
        %v229 = vld [vmem:[#allocation5 + $0x58] sm:$0xff]
        %v230 = vld [vmem:[#allocation5 + $0x60] sm:$0xff]
        %v231 = vld [vmem:[#allocation5 + $0x68] sm:$0xff]
        %v232 = vld [vmem:[#allocation5 + $0x70] sm:$0xff]
        %v233 = vld [vmem:[#allocation5 + $0x78] sm:$0xff]
        %v234 = vld [vmem:[%s2] sm:$0x1]
        %v236 = vlaneseq
        %v237 = vshrl.u32 %v236, 7
        %v238 = vsub.s32 0, %v237
        %v239 = vrot.slane %v234, %v238
        %241 = vmatprep.subr.mxu0 0.0
        %242 = vmatpush1.msra.mxu0 %v218
        %243 = vmatprep.subr.mxu0 0.0
        %244 = vmatpush1.msra.mxu0 %v219
        %245 = vmatprep.subr.mxu0 0.0
        %246 = vmatpush1.msra.mxu0 %v220
        %247 = vmatprep.subr.mxu0 0.0
        %248 = vmatpush1.msra.mxu0 %v221
        %249 = vmatprep.subr.mxu0 0.0
        %250 = vmatpush1.msra.mxu0 %v222
        %251 = vmatprep.subr.mxu0 0.0
        %252 = vmatpush1.msra.mxu0 %v223
        %253 = vmatprep.subr.mxu0 0.0
        %254 = vmatpush1.msra.mxu0 %v224
        %255 = vmatprep.subr.mxu0 0.0
        %256 = vmatpush1.msra.mxu0 %v225
        %257 = vmatprep.subr.mxu0 0.0
        %258 = vmatpush1.msra.mxu0 %v226
        %259 = vmatprep.subr.mxu0 0.0
        %260 = vmatpush1.msra.mxu0 %v227
        %261 = vmatprep.subr.mxu0 0.0
        %262 = vmatpush1.msra.mxu0 %v228
        %263 = vmatprep.subr.mxu0 0.0
        %264 = vmatpush1.msra.mxu0 %v229
        %265 = vmatprep.subr.mxu0 0.0
        %266 = vmatpush1.msra.mxu0 %v230
        %267 = vmatprep.subr.mxu0 0.0
        %268 = vmatpush1.msra.mxu0 %v231
        %269 = vmatprep.subr.mxu0 0.0
        %270 = vmatpush1.msra.mxu0 %v232
        %271 = vmatprep.subr.mxu0 0.0
        %272 = vmatpush1.msra.mxu0 %v233
        %273 = vmatprep.subr.mxu0 0.0
        %274 = vmatpush1.msra.mxu0 0.0
        %275 = vmatprep.subr.mxu0 0.0
        %276 = vmatpush1.msra.mxu0 0.0
        %277 = vmatprep.subr.mxu0 0.0
        %278 = vmatpush1.msra.mxu0 0.0
        %279 = vmatprep.subr.mxu0 0.0
        %280 = vmatpush1.msra.mxu0 0.0
        %281 = vmatprep.subr.mxu0 0.0
        %282 = vmatpush1.msra.mxu0 0.0
        %283 = vmatprep.subr.mxu0 0.0
        %284 = vmatpush1.msra.mxu0 0.0
        %285 = vmatprep.subr.mxu0 0.0
        %286 = vmatpush1.msra.mxu0 0.0
        %287 = vmatprep.subr.mxu0 0.0
        %288 = vmatpush1.msra.mxu0 0.0
        %289 = vmatprep.subr.mxu0 0.0
        %290 = vmatpush1.msra.mxu0 0.0
        %291 = vmatprep.subr.mxu0 0.0
        %292 = vmatpush1.msra.mxu0 0.0
        %293 = vmatprep.subr.mxu0 0.0
        %294 = vmatpush1.msra.mxu0 0.0
        %295 = vmatprep.subr.mxu0 0.0
        %296 = vmatpush1.msra.mxu0 0.0
        %297 = vmatprep.subr.mxu0 0.0
        %298 = vmatpush1.msra.mxu0 0.0
        %299 = vmatprep.subr.mxu0 0.0
        %300 = vmatpush1.msra.mxu0 0.0
        %301 = vmatprep.subr.mxu0 0.0
        %302 = vmatpush1.msra.mxu0 0.0
        %303 = vmatprep.subr.mxu0 0.0
        %304 = vmatpush1.msra.mxu0 0.0
        %305 = vmatprep.mubr.f32.mxu0 0.0
        %306 = vmatmul.mubr.f32.gmra.mrb[0].mxu0 %v217
        %v307 = vpop.f32.mrb[0].mxu0
        %v308 = vadd.f32 %v239, %v307
        %v309 = vpop.f32.mrb[0].mxu0
        %310 = vdwg.mxu0
        %v311 = vlaneseq
        %v312 = vshrl.u32 %v311, 7
        %v313 = vstv %s215
        %v314 = vadd.s32 %v313, %v312
        %s315 = sadd.s32 %s26, 1
        // While loop
        $region41: #{tpu_custom_call.1} parent=31 // loop_pre_header
          _
        $region42: #{tpu_custom_call.1} parent=31 // loop_header
          %s317 = sphi 0, %s319
          %p318 = scmp.ge.s32.totalorder %s317, %s315
          %v322 = vphi 0.0, %v483
          %v323 = vphi 0.0, %v409
        $region43: #{tpu_custom_call.1} parent=31 // loop_header_branch
          %321 = sbr.rel (%p318) target = $region47
        $region44: #{tpu_custom_call.1} parent=31 // loop_body
          %s324 = smul.u32 %s317, 8
          %s325 = scalar_lea.vmem %s188, %s324 [#allocation2]
          %v326 = vld [vmem:[%s325] sm:$0xff]
          %327 = vmatprep.subr.mxu0 0.0
          %328 = vmatpush1.xpose.msra.mxu0 %v326
          %329 = vmatprep.subr.mxu0 0.0
          %330 = vmatpush1.xpose.msra.mxu0 0.0
          %331 = vmatprep.subr.mxu0 0.0
          %332 = vmatpush1.xpose.msra.mxu0 0.0
          %333 = vmatprep.subr.mxu0 0.0
          %334 = vmatpush1.xpose.msra.mxu0 0.0
          %335 = vmatprep.subr.mxu0 0.0
          %336 = vmatpush1.xpose.msra.mxu0 0.0
          %337 = vmatprep.subr.mxu0 0.0
          %338 = vmatpush1.xpose.msra.mxu0 0.0
          %339 = vmatprep.subr.mxu0 0.0
          %340 = vmatpush1.xpose.msra.mxu0 0.0
          %341 = vmatprep.subr.mxu0 0.0
          %342 = vmatpush1.xpose.msra.mxu0 0.0
          %343 = vmatprep.subr.mxu0 0.0
          %344 = vmatpush1.xpose.msra.mxu0 0.0
          %345 = vmatprep.subr.mxu0 0.0
          %346 = vmatpush1.xpose.msra.mxu0 0.0
          %347 = vmatprep.subr.mxu0 0.0
          %348 = vmatpush1.xpose.msra.mxu0 0.0
          %349 = vmatprep.subr.mxu0 0.0
          %350 = vmatpush1.xpose.msra.mxu0 0.0
          %351 = vmatprep.subr.mxu0 0.0
          %352 = vmatpush1.xpose.msra.mxu0 0.0
          %353 = vmatprep.subr.mxu0 0.0
          %354 = vmatpush1.xpose.msra.mxu0 0.0
          %355 = vmatprep.subr.mxu0 0.0
          %356 = vmatpush1.xpose.msra.mxu0 0.0
          %357 = vmatprep.subr.mxu0 0.0
          %358 = vmatpush1.xpose.msra.mxu0 0.0
          %359 = vmatprep.subr.mxu0 0.0
          %360 = vmatpush1.xpose.msra.mxu0 0.0
          %361 = vmatprep.subr.mxu0 0.0
          %362 = vmatpush1.xpose.msra.mxu0 0.0
          %363 = vmatprep.subr.mxu0 0.0
          %364 = vmatpush1.xpose.msra.mxu0 0.0
          %365 = vmatprep.subr.mxu0 0.0
          %366 = vmatpush1.xpose.msra.mxu0 0.0
          %367 = vmatprep.subr.mxu0 0.0
          %368 = vmatpush1.xpose.msra.mxu0 0.0
          %369 = vmatprep.subr.mxu0 0.0
          %370 = vmatpush1.xpose.msra.mxu0 0.0
          %371 = vmatprep.subr.mxu0 0.0
          %372 = vmatpush1.xpose.msra.mxu0 0.0
          %373 = vmatprep.subr.mxu0 0.0
          %374 = vmatpush1.xpose.msra.mxu0 0.0
          %375 = vmatprep.subr.mxu0 0.0
          %376 = vmatpush1.xpose.msra.mxu0 0.0
          %377 = vmatprep.subr.mxu0 0.0
          %378 = vmatpush1.xpose.msra.mxu0 0.0
          %379 = vmatprep.subr.mxu0 0.0
          %380 = vmatpush1.xpose.msra.mxu0 0.0
          %381 = vmatprep.subr.mxu0 0.0
          %382 = vmatpush1.xpose.msra.mxu0 0.0
          %383 = vmatprep.subr.mxu0 0.0
          %384 = vmatpush1.xpose.msra.mxu0 0.0
          %385 = vmatprep.subr.mxu0 0.0
          %386 = vmatpush1.xpose.msra.mxu0 0.0
          %387 = vmatprep.subr.mxu0 0.0
          %388 = vmatpush1.xpose.msra.mxu0 0.0
          %389 = vmatprep.subr.mxu0 0.0
          %390 = vmatpush1.xpose.msra.mxu0 0.0
          %391 = vmatprep.mubr.f32.mxu0 0.0
          %392 = vmatmul.mubr.f32.gmra.mrb[0].mxu0 %v308
          %v393 = vpop.f32.mrb[0].mxu0
          %v394 = vadd.f32 0.0, %v393
          %v395 = vpop.f32.mrb[0].mxu0
          %396 = vdwg.mxu0
          %v397 = vmul.f32 %v394, 1.442695
          %v398 = vpow.pop %v397
          %v399 = vlaneseq
          %v400 = vand.u32 %v399, 127
          %v401 = vstv %s324
          %v402 = vadd.s32 %v401, %v400
          %vm403 = vcmp.gt.s32.totalorder %v314, %v402
          %v404 = vsel %vm403, %v398, 0.0
          %vm405 = vcmask 64512
          %v406 = vsel %vm405, %v404, 0.0
          %407 = vadd.xlane.f32.xlu0 %v406
          %v408 = vpop.xlane.xlu0 %407
          %v409 = vadd.f32 %v323, %v408
          %v411 = vsel %vm405, %v404, 0
          %413 = vmatprep.subr.mxu0 0.0
          %414 = vmatpush1.msra.mxu0 %v326
          %415 = vmatprep.subr.mxu0 0.0
          %416 = vmatpush1.msra.mxu0 0.0
          %417 = vmatprep.subr.mxu0 0.0
          %418 = vmatpush1.msra.mxu0 0.0
          %419 = vmatprep.subr.mxu0 0.0
          %420 = vmatpush1.msra.mxu0 0.0
          %421 = vmatprep.subr.mxu0 0.0
          %422 = vmatpush1.msra.mxu0 0.0
          %423 = vmatprep.subr.mxu0 0.0
          %424 = vmatpush1.msra.mxu0 0.0
          %425 = vmatprep.subr.mxu0 0.0
          %426 = vmatpush1.msra.mxu0 0.0
          %427 = vmatprep.subr.mxu0 0.0
          %428 = vmatpush1.msra.mxu0 0.0
          %429 = vmatprep.subr.mxu0 0.0
          %430 = vmatpush1.msra.mxu0 0.0
          %431 = vmatprep.subr.mxu0 0.0
          %432 = vmatpush1.msra.mxu0 0.0
          %433 = vmatprep.subr.mxu0 0.0
          %434 = vmatpush1.msra.mxu0 0.0
          %435 = vmatprep.subr.mxu0 0.0
          %436 = vmatpush1.msra.mxu0 0.0
          %437 = vmatprep.subr.mxu0 0.0
          %438 = vmatpush1.msra.mxu0 0.0
          %439 = vmatprep.subr.mxu0 0.0
          %440 = vmatpush1.msra.mxu0 0.0
          %441 = vmatprep.subr.mxu0 0.0
          %442 = vmatpush1.msra.mxu0 0.0
          %443 = vmatprep.subr.mxu0 0.0
          %444 = vmatpush1.msra.mxu0 0.0
          %445 = vmatprep.subr.mxu0 0.0
          %446 = vmatpush1.msra.mxu0 0.0
          %447 = vmatprep.subr.mxu0 0.0
          %448 = vmatpush1.msra.mxu0 0.0
          %449 = vmatprep.subr.mxu0 0.0
          %450 = vmatpush1.msra.mxu0 0.0
          %451 = vmatprep.subr.mxu0 0.0
          %452 = vmatpush1.msra.mxu0 0.0
          %453 = vmatprep.subr.mxu0 0.0
          %454 = vmatpush1.msra.mxu0 0.0
          %455 = vmatprep.subr.mxu0 0.0
          %456 = vmatpush1.msra.mxu0 0.0
          %457 = vmatprep.subr.mxu0 0.0
          %458 = vmatpush1.msra.mxu0 0.0
          %459 = vmatprep.subr.mxu0 0.0
          %460 = vmatpush1.msra.mxu0 0.0
          %461 = vmatprep.subr.mxu0 0.0
          %462 = vmatpush1.msra.mxu0 0.0
          %463 = vmatprep.subr.mxu0 0.0
          %464 = vmatpush1.msra.mxu0 0.0
          %465 = vmatprep.subr.mxu0 0.0
          %466 = vmatpush1.msra.mxu0 0.0
          %467 = vmatprep.subr.mxu0 0.0
          %468 = vmatpush1.msra.mxu0 0.0
          %469 = vmatprep.subr.mxu0 0.0
          %470 = vmatpush1.msra.mxu0 0.0
          %471 = vmatprep.subr.mxu0 0.0
          %472 = vmatpush1.msra.mxu0 0.0
          %473 = vmatprep.subr.mxu0 0.0
          %474 = vmatpush1.msra.mxu0 0.0
          %475 = vmatprep.subr.mxu0 0.0
          %476 = vmatpush1.msra.mxu0 0.0
          %477 = vmatprep.mubr.f32.mxu0 0.0
          %478 = vmatmul.mubr.f32.gmra.mrb[0].mxu0 %v411
          %v479 = vpop.f32.mrb[0].mxu0
          %v480 = vadd.f32 0.0, %v479
          %v481 = vpop.f32.mrb[0].mxu0
          %482 = vdwg.mxu0
          %v483 = vadd.f32 %v322, %v480
        $region45: #{tpu_custom_call.1} parent=31 // loop_footer
          %s319 = sadd.s32 %s317, 1
        $region46: #{tpu_custom_call.1} parent=31 // loop_footer_branch
          %316 = sbr.rel target = $region42
        $region47: #{tpu_custom_call.1} parent=31 // loop_exit
          _
        %v484 = vadd.f32 %v323, 1e-10
        %v485 = vrcp.pop %v484
        %v486 = vmul.f32 %v322, %v485
        %487 = vst [vmem:[%s214] sm:$0xff] %v486
        %s488 = sand.u32 %s111, 1
        %s489 = scalar_lea.sflag [#allocation4], %s488
        %s490 = sand.u32 %s111, 1
        %s491 = smul.addr %s490, 8
        %s492 = scalar_lea.vmem [#allocation7], %s491
        // Predicated region
        $region48: #{tpu_custom_call.1} parent=31 // pred_check
          %p493 = pneg %p121
        $region49: #{tpu_custom_call.1} parent=31 // pred_check_branch
          %495 = sbr.rel (%p493) target = $region51
        $region50: #{tpu_custom_call.1} parent=31 // pred_region
          %s497 = ssub.s32 128, 128
          %498 = vsyncadd %s489, %s497
          %s499 = sadd.s32 %s26, %s25
          %s500 = smul.addr %s499, 128
          %s501 = scalar_lea.hbm %s3, %s500
          %s503 = sshll.u32 %s492, 4
          %s504 = int_to_ptr.vmem [resolvable:$true] %s503
          %506 = dma.vmem_to_hbm [thread:$0]  %s504, 128, %s501, %s489
        $region51: #{tpu_custom_call.1} parent=31 // pred_fallthru
          _
      $region32: #{tpu_custom_call.1} parent=5 // pred_fallthru
        _
      %p507 = scmp.le.s32.totalorder 2, %s16
      // Predicated region
      $region52: #{tpu_custom_call.1} parent=5 // pred_check
        %p508 = pneg %p507
      $region53: #{tpu_custom_call.1} parent=5 // pred_check_branch
        %510 = sbr.rel (%p508) target = $region55
      $region54: #{tpu_custom_call.1} parent=5 // pred_region
        %s511 = ssub.s32 %s16, 2
        // Predicated region
        $region56: #{tpu_custom_call.1} parent=54 // pred_check
          %p512 = pneg %p127
        $region57: #{tpu_custom_call.1} parent=54 // pred_check_branch
          %514 = sbr.rel (%p512) target = $region59
        $region58: #{tpu_custom_call.1} parent=54 // pred_region
          %s515 = sand.u32 %s112, 1
          %s516 = scalar_lea.sflag [#allocation4], %s515
          %s517 = sand.u32 %s112, 1
          %s518 = smul.addr %s517, 8
          %s519 = scalar_lea.vmem [#allocation7], %s518
          %520 = dma.done %s516, 128
        $region59: #{tpu_custom_call.1} parent=54 // pred_fallthru
          _
      $region55: #{tpu_custom_call.1} parent=5 // pred_fallthru
        _
    $region6: #{tpu_custom_call.1} parent=1 // loop_footer
      %s20 = sadd.s32 1, %s16
    $region7: #{tpu_custom_call.1} parent=1 // loop_footer_branch
      %15 = sbr.rel target = $region3
    $region8: #{tpu_custom_call.1} parent=1 // loop_exit
      _
    %521 = vsyncpa [#allocation3], 1
    %s522 = scalar_lea.sflag [#allocation3], 1
    %523 = vsyncpa %s522, 1
    %524 = vsyncpa [#allocation6], 1
    %525 = vsyncpa [#allocation4], 1
    %s526 = scalar_lea.sflag [#allocation4], 1
    %527 = vsyncpa %s526, 1

</llo_original>
